<compile_context>
chip_gen: v5e
topology: v5e:2x2
jax: 0.10.0
libtpu: 0.0.40
codegen_flags: <defaults>
</compile_context>

<pallas_src>
import jax
import jax.numpy as jnp
import numpy as np
from jax.experimental import pallas as pl
from jax.experimental.pallas import tpu as pltpu

INPUT_SIZE = 6
H1, H2, H3, H4 = 128, 64, 32, 1
K_PAD = 8                     # fc1 contraction padded to one sublane group
LANE = 128
CHUNK = 256                   # in-kernel batch sub-chunk (h1 = 32 vregs in f32)
DEFAULT_TILE_B = 4096         # streamed x tile: 8*4096*4 B = 128 KiB << VMEM


def _round_up(n, m):
    return ((n + m - 1) // m) * m


def _choose_tile_b(batch, max_tile=DEFAULT_TILE_B):
    """Pick the batch tile: big enough to amortize per-step overhead, small
    enough to keep padding waste <= ~10% and (when possible) a grid of >= 2
    steps for v7x megacore sharding."""
    padded_min = _round_up(batch, LANE)
    if padded_min <= CHUNK:
        return padded_min                       # single small tile (128/256)
    half = (padded_min // 2) // CHUNK * CHUNK   # cap so grid >= 2 when possible
    tb = min(max_tile, half) if half >= CHUNK else CHUNK
    while tb > CHUNK:
        waste = _round_up(batch, tb) - padded_min
        if waste <= max(CHUNK, padded_min // 10):
            return tb
        tb -= CHUNK
    return CHUNK


def mlp_kernel(x_ref, w1_ref, w2_ref, b2_ref, w3_ref, b3_ref, w4_ref, b4_ref,
               o_ref):
    # Everything is (features, batch): batch rides the 128-lane axis so the
    # output (1, tb) store is lane-dense.
    tb = x_ref.shape[1]
    chunk = min(CHUNK, tb)

    w1 = w1_ref[...]                       # (128, 8)  fc1 bias folded in col 6
    w2 = w2_ref[...]                       # (64, 128)
    b2 = b2_ref[...]                       # (64, 1)   f32
    w3 = w3_ref[...]                       # (32, 64)
    b3 = b3_ref[...]                       # (32, 1)   f32
    w4 = w4_ref[...]                       # (32, 1)   f32
    b4 = b4_ref[...]                       # (1, 1)    f32
    mm = w2.dtype                          # matmul input dtype (f32 or bf16)

    # Static unrolled chunk loop (equivalently lax.fori_loop(..., unroll=True));
    # each chunk's h1/h2/h3 live entirely in vregs -> no spill round-trips.
    for c in range(tb // chunk):
        sl = pl.ds(c * chunk, chunk)
        xc = x_ref[:, sl].astype(w1.dtype)                         # (8, chunk)

        # fc1 on the MXU (K=8); bias comes from the ones row of x_aug.
        h1 = jnp.dot(w1, xc, preferred_element_type=jnp.float32)   # (128, chunk)
        h1 = jnp.maximum(h1, 0.0)

        # fc2 / fc3: MXU matmuls, f32 accumulation, f32 bias/ReLU (v5e-safe).
        h2 = jnp.dot(w2, h1.astype(mm),
                     preferred_element_type=jnp.float32) + b2      # (64, chunk)
        h2 = jnp.maximum(h2, 0.0)
        h3 = jnp.dot(w3, h2.astype(mm),
                     preferred_element_type=jnp.float32) + b3      # (32, chunk)
        h3 = jnp.maximum(h3, 0.0)

        # fc4 (N=1): elementwise multiply + sublane reduce (MXU gain negligible).
        z4 = jnp.sum(h3 * w4, axis=0, keepdims=True) + b4          # (1, chunk)
        o_ref[:, sl] = jax.nn.sigmoid(z4)


def neural_net_forward(x, params, *, max_tile_b=DEFAULT_TILE_B,
                       matmul_dtype=jnp.float32):
    """x: (B, 6) float32.  params: PyTorch-layout w_i (out, in), b_i (out, 1).

    Returns (B, 1), matching NeuralNet.forward.  matmul_dtype=jnp.bfloat16
    casts the matmul inputs only (f32 accumulation / elementwise) for the
    bf16-native v6e/v7x MXUs.
    """
    batch = x.shape[0]
    tb = _choose_tile_b(batch, max_tile_b)
    padded = _round_up(batch, tb)
    grid = padded // tb

    # Feature-major (8, B) input: rows 0-5 = x^T, row 6 = ones (fc1 bias tap),
    # row 7 = zeros (K padding to a full sublane group).  Wrapper-side layout
    # plumbing only; all compute is inside the kernel.
    x_t = jnp.transpose(x).astype(jnp.float32)                       # (6, B)
    x_aug = jnp.concatenate(
        [x_t,
         jnp.ones((1, batch), jnp.float32),
         jnp.zeros((1, batch), jnp.float32)], axis=0)                # (8, B)
    if padded != batch:
        x_aug = jnp.pad(x_aug, ((0, 0), (0, padded - batch)))

    w1a = jnp.concatenate(
        [params["w1"], params["b1"], jnp.zeros((H1, 1), jnp.float32)],
        axis=1).astype(matmul_dtype)                                 # (128, 8)
    w2 = params["w2"].astype(matmul_dtype)                           # (64, 128)
    w3 = params["w3"].astype(matmul_dtype)                           # (32, 64)
    b2 = params["b2"]                                                # (64, 1)
    b3 = params["b3"]                                                # (32, 1)
    w4t = jnp.transpose(params["w4"])                                # (32, 1)
    b4 = params["b4"]                                                # (1, 1)

    def resident(shape):
        # Same block every grid step -> DMA'd once, stays resident in VMEM.
        return pl.BlockSpec(shape, lambda i: (0, 0))

    flops = 2 * padded * (K_PAD * H1 + H1 * H2 + H2 * H3 + H3 * H4)
    weight_bytes = sum(int(np.prod(p.shape)) * p.dtype.itemsize
                       for p in (w1a, w2, b2, w3, b3, w4t, b4))
    cost = pl.CostEstimate(
        flops=flops,
        transcendentals=padded,                                      # sigmoid
        bytes_accessed=padded * (K_PAD + 1) * 4 + weight_bytes)

    out = pl.pallas_call(
        mlp_kernel,
        out_shape=jax.ShapeDtypeStruct((1, padded), jnp.float32),
        grid=(grid,),
        in_specs=[
            pl.BlockSpec((K_PAD, tb), lambda i: (0, i)),   # x streams in tiles
            resident((H1, K_PAD)),
            resident((H2, H1)), resident((H2, 1)),
            resident((H3, H2)), resident((H3, 1)),
            resident((H3, 1)),  resident((1, 1)),
        ],
        out_specs=pl.BlockSpec((1, tb), lambda i: (0, i)),
        compiler_params=pltpu.CompilerParams(
            dimension_semantics=("parallel",)),            # v7x: 2 TCs on batch
        cost_estimate=cost,
    )(x_aug, w1a, w2, b2, w3, b3, w4t, b4)

    return jnp.transpose(out[:, :batch])                   # (B, 1)


def init_params(key):
    """Matches nn.Linear default init: U(-1/sqrt(fan_in), 1/sqrt(fan_in)).
    Weights stored PyTorch-style (out, in); biases as (out, 1) columns."""
    sizes = (INPUT_SIZE, H1, H2, H3, H4)
    params = {}
    for i in range(4):
        fan_in, fan_out = sizes[i], sizes[i + 1]
        key, kw, kb = jax.random.split(key, 3)
        bound = 1.0 / np.sqrt(fan_in)
        params[f"w{i+1}"] = jax.random.uniform(
            kw, (fan_out, fan_in), jnp.float32, -bound, bound)
        params[f"b{i+1}"] = jax.random.uniform(
            kb, (fan_out, 1), jnp.float32, -bound, bound)
    return params


def reference_forward(x, params):
    h = x
    for i in range(1, 4):
        h = jnp.maximum(h @ params[f"w{i}"].T + params[f"b{i}"].T, 0.0)
    return jax.nn.sigmoid(h @ params["w4"].T + params["b4"].T)


if __name__ == "__main__":
    key = jax.random.PRNGKey(0)
    key, kx = jax.random.split(key)
    params = init_params(key)

    # Small-batch f32 check (single 128-lane tile, grid=1).
    x_small = jax.random.normal(kx, (8, INPUT_SIZE), jnp.float32)
    out_small = neural_net_forward(x_small, params)
    jax.block_until_ready(out_small)
    ref_small = reference_forward(x_small, params)
    np.testing.assert_allclose(np.asarray(out_small), np.asarray(ref_small),
                               rtol=1e-4, atol=2e-5)

    # Multi-tile path: grid=2 tiles of 1024, 4x 256-lane in-kernel chunks, f32.
    key, kx2 = jax.random.split(key)
    x_big = jax.random.normal(kx2, (2048, INPUT_SIZE), jnp.float32)
    out_big = neural_net_forward(x_big, params)
    jax.block_until_ready(out_big)
    ref_big = reference_forward(x_big, params)
    np.testing.assert_allclose(np.asarray(out_big), np.asarray(ref_big),
                               rtol=1e-4, atol=2e-5)

    # Same path with bf16 matmul inputs (v6e/v7x MXU-native), looser tolerance.
    out_bf16 = neural_net_forward(x_big, params, matmul_dtype=jnp.bfloat16)
    jax.block_until_ready(out_bf16)
    np.testing.assert_allclose(np.asarray(out_bf16), np.asarray(ref_big),
                               rtol=2e-2, atol=2e-2)

    print("KERNEL_OK")
</pallas_src>

<mosaic_0001>
module attributes {stable_mosaic.version = 11 : i64} {
  func.func @mlp_kernel(%arg0: i32, %arg1: memref<8x128xf32, #tpu.memory_space<vmem>>, %arg2: memref<128x8xf32, #tpu.memory_space<vmem>>, %arg3: memref<64x128xf32, #tpu.memory_space<vmem>>, %arg4: memref<64x1xf32, #tpu.memory_space<vmem>>, %arg5: memref<32x64xf32, #tpu.memory_space<vmem>>, %arg6: memref<32x1xf32, #tpu.memory_space<vmem>>, %arg7: memref<32x1xf32, #tpu.memory_space<vmem>>, %arg8: memref<1x1xf32, #tpu.memory_space<vmem>>, %arg9: memref<1x128xf32, #tpu.memory_space<vmem>>) attributes {dimension_semantics = [#tpu.dimension_semantics<parallel>], iteration_bounds = array<i64: 1>, scalar_prefetch = 0 : i64, scratch_operands = 0 : i64, tpu.core_type = #tpu.core_type<tc>, window_params = [{transform_indices = @transform_0, window_bounds = array<i64: 8, 128>}, {pipeline_mode = #tpu.pipeline_mode<synchronous>, transform_indices = @transform_1, window_bounds = array<i64: 128, 8>}, {pipeline_mode = #tpu.pipeline_mode<synchronous>, transform_indices = @transform_2, window_bounds = array<i64: 64, 128>}, {pipeline_mode = #tpu.pipeline_mode<synchronous>, transform_indices = @transform_3, window_bounds = array<i64: 64, 1>}, {pipeline_mode = #tpu.pipeline_mode<synchronous>, transform_indices = @transform_4, window_bounds = array<i64: 32, 64>}, {pipeline_mode = #tpu.pipeline_mode<synchronous>, transform_indices = @transform_5, window_bounds = array<i64: 32, 1>}, {pipeline_mode = #tpu.pipeline_mode<synchronous>, transform_indices = @transform_6, window_bounds = array<i64: 32, 1>}, {pipeline_mode = #tpu.pipeline_mode<synchronous>, transform_indices = @transform_7, window_bounds = array<i64: 1, 1>}, {transform_indices = @transform_8, window_bounds = array<i64: 1, 128>}]} {
    %c0 = arith.constant 0 : index
    %c0_0 = arith.constant 0 : index
    %0 = vector.load %arg2[%c0, %c0_0] : memref<128x8xf32, #tpu.memory_space<vmem>>, vector<128x8xf32>
    %c0_1 = arith.constant 0 : index
    %c0_2 = arith.constant 0 : index
    %1 = vector.load %arg3[%c0_1, %c0_2] : memref<64x128xf32, #tpu.memory_space<vmem>>, vector<64x128xf32>
    %c0_3 = arith.constant 0 : index
    %c0_4 = arith.constant 0 : index
    %2 = vector.load %arg4[%c0_3, %c0_4] : memref<64x1xf32, #tpu.memory_space<vmem>>, vector<64x1xf32>
    %c0_5 = arith.constant 0 : index
    %c0_6 = arith.constant 0 : index
    %3 = vector.load %arg5[%c0_5, %c0_6] : memref<32x64xf32, #tpu.memory_space<vmem>>, vector<32x64xf32>
    %c0_7 = arith.constant 0 : index
    %c0_8 = arith.constant 0 : index
    %4 = vector.load %arg6[%c0_7, %c0_8] : memref<32x1xf32, #tpu.memory_space<vmem>>, vector<32x1xf32>
    %c0_9 = arith.constant 0 : index
    %c0_10 = arith.constant 0 : index
    %5 = vector.load %arg7[%c0_9, %c0_10] : memref<32x1xf32, #tpu.memory_space<vmem>>, vector<32x1xf32>
    %c0_11 = arith.constant 0 : index
    %c0_12 = arith.constant 0 : index
    %6 = vector.load %arg8[%c0_11, %c0_12] : memref<1x1xf32, #tpu.memory_space<vmem>>, vector<1x1xf32>
    %c0_13 = arith.constant 0 : index
    %c0_14 = arith.constant 0 : index
    %7 = vector.load %arg1[%c0_13, %c0_14] : memref<8x128xf32, #tpu.memory_space<vmem>>, vector<8x128xf32>
    %cst = arith.constant dense<0.000000e+00> : vector<128x128xf32>
    %8 = tpu.matmul %0, %7, %cst {dimension_numbers = #tpu.dot_dimension_numbers<[1], [0], [0], [1], [0, 0, 1, 1], [], []>} : vector<128x8xf32>, vector<8x128xf32>, vector<128x128xf32> -> vector<128x128xf32>
    %cst_15 = arith.constant 0.000000e+00 : f32
    %9 = vector.broadcast %cst_15 : f32 to vector<128x128xf32>
    %10 = arith.maximumf %8, %9 : vector<128x128xf32>
    %cst_16 = arith.constant dense<0.000000e+00> : vector<64x128xf32>
    %11 = tpu.matmul %1, %10, %cst_16 {dimension_numbers = #tpu.dot_dimension_numbers<[1], [0], [0], [1], [0, 0, 1, 1], [], []>} : vector<64x128xf32>, vector<128x128xf32>, vector<64x128xf32> -> vector<64x128xf32>
    %12 = vector.broadcast %2 : vector<64x1xf32> to vector<64x128xf32>
    %13 = arith.addf %11, %12 : vector<64x128xf32>
    %cst_17 = arith.constant 0.000000e+00 : f32
    %14 = vector.broadcast %cst_17 : f32 to vector<64x128xf32>
    %15 = arith.maximumf %13, %14 : vector<64x128xf32>
    %cst_18 = arith.constant dense<0.000000e+00> : vector<32x128xf32>
    %16 = tpu.matmul %3, %15, %cst_18 {dimension_numbers = #tpu.dot_dimension_numbers<[1], [0], [0], [1], [0, 0, 1, 1], [], []>} : vector<32x64xf32>, vector<64x128xf32>, vector<32x128xf32> -> vector<32x128xf32>
    %17 = vector.broadcast %4 : vector<32x1xf32> to vector<32x128xf32>
    %18 = arith.addf %16, %17 : vector<32x128xf32>
    %cst_19 = arith.constant 0.000000e+00 : f32
    %19 = vector.broadcast %cst_19 : f32 to vector<32x128xf32>
    %20 = arith.maximumf %18, %19 : vector<32x128xf32>
    %21 = vector.broadcast %5 : vector<32x1xf32> to vector<32x128xf32>
    %22 = arith.mulf %20, %21 : vector<32x128xf32>
    %cst_20 = arith.constant dense<0.000000e+00> : vector<128xf32>
    %23 = vector.multi_reduction <add>, %22, %cst_20 [0] : vector<32x128xf32> to vector<128xf32>
    %24 = vector.shape_cast %23 : vector<128xf32> to vector<1x128xf32>
    %25 = vector.broadcast %6 : vector<1x1xf32> to vector<1x128xf32>
    %26 = arith.addf %24, %25 : vector<1x128xf32>
    %27 = arith.negf %26 : vector<1x128xf32>
    %28 = math.exp %27 : vector<1x128xf32>
    %cst_21 = arith.constant 1.000000e+00 : f32
    %29 = vector.broadcast %cst_21 : f32 to vector<1x128xf32>
    %30 = arith.addf %29, %28 : vector<1x128xf32>
    %31 = arith.divf %29, %30 : vector<1x128xf32>
    %c0_22 = arith.constant 0 : index
    %c0_23 = arith.constant 0 : index
    %32 = vector.load %arg9[%c0_22, %c0_23] : memref<1x128xf32, #tpu.memory_space<vmem>>, vector<1x128xf32>
    tpu.vector_store %arg9[%c0_22, %c0_23], %31 {strides = array<i32>} : memref<1x128xf32, #tpu.memory_space<vmem>>, vector<1x128xf32>,
    return
  }
  func.func @transform_0(%arg0: i32) -> (i32, i32) {
    %c0_i32 = arith.constant 0 : i32
    %c0_i32_0 = arith.constant 0 : i32
    return %c0_i32, %arg0 : i32, i32
  }
  func.func @transform_1(%arg0: i32) -> (i32, i32) {
    %c0_i32 = arith.constant 0 : i32
    %c0_i32_0 = arith.constant 0 : i32
    %c0_i32_1 = arith.constant 0 : i32
    return %c0_i32, %c0_i32_0 : i32, i32
  }
  func.func @transform_2(%arg0: i32) -> (i32, i32) {
    %c0_i32 = arith.constant 0 : i32
    %c0_i32_0 = arith.constant 0 : i32
    %c0_i32_1 = arith.constant 0 : i32
    return %c0_i32, %c0_i32_0 : i32, i32
  }
  func.func @transform_3(%arg0: i32) -> (i32, i32) {
    %c0_i32 = arith.constant 0 : i32
    %c0_i32_0 = arith.constant 0 : i32
    %c0_i32_1 = arith.constant 0 : i32
    return %c0_i32, %c0_i32_0 : i32, i32
  }
  func.func @transform_4(%arg0: i32) -> (i32, i32) {
    %c0_i32 = arith.constant 0 : i32
    %c0_i32_0 = arith.constant 0 : i32
    %c0_i32_1 = arith.constant 0 : i32
    return %c0_i32, %c0_i32_0 : i32, i32
  }
  func.func @transform_5(%arg0: i32) -> (i32, i32) {
    %c0_i32 = arith.constant 0 : i32
    %c0_i32_0 = arith.constant 0 : i32
    %c0_i32_1 = arith.constant 0 : i32
    return %c0_i32, %c0_i32_0 : i32, i32
  }
  func.func @transform_6(%arg0: i32) -> (i32, i32) {
    %c0_i32 = arith.constant 0 : i32
    %c0_i32_0 = arith.constant 0 : i32
    %c0_i32_1 = arith.constant 0 : i32
    return %c0_i32, %c0_i32_0 : i32, i32
  }
  func.func @transform_7(%arg0: i32) -> (i32, i32) {
    %c0_i32 = arith.constant 0 : i32
    %c0_i32_0 = arith.constant 0 : i32
    %c0_i32_1 = arith.constant 0 : i32
    return %c0_i32, %c0_i32_0 : i32, i32
  }
  func.func @transform_8(%arg0: i32) -> (i32, i32) {
    %c0_i32 = arith.constant 0 : i32
    %c0_i32_0 = arith.constant 0 : i32
    return %c0_i32, %arg0 : i32, i32
  }
}

</mosaic_0001>

<llo_original>
// kernel: tpu_custom_call.1
$region0: #{tpu_custom_call.1}
  #allocation0 [shape = 'u32[]', space=smem, size = 0x4, offset = 0x4, fixed_abs, tag = 'smem constant byte address 0x4 - core index']
  #allocation1 [shape = 'u32[72,128]{1,0:T(1,128)}', space=vmem, size = 0x9000, scoped, tag = 'internal scratch']
  #allocation2 [shape = 'f32[1,1]{1,0:T(1,128)S(1)}', space=vmem, size = 0x200, scoped, tag = 'scoped memory for tpu_custom_call.1']
  %s0 = inlined_call_operand.vmem [shape: f32[8,128], index: 0, kind: input, shape index: {}]
  %s1 = inlined_call_operand.vmem [shape: f32[128,8], index: 1, kind: input, shape index: {}]
  %s2 = inlined_call_operand.vmem [shape: f32[64,128], index: 2, kind: input, shape index: {}]
  %s3 = inlined_call_operand.vmem [shape: f32[64,1], index: 3, kind: input, shape index: {}]
  %s4 = inlined_call_operand.vmem [shape: f32[32,64], index: 4, kind: input, shape index: {}]
  %s5 = inlined_call_operand.vmem [shape: f32[32,1], index: 5, kind: input, shape index: {}]
  %s6 = inlined_call_operand.vmem [shape: f32[32,1], index: 6, kind: input, shape index: {}]
  %s7 = inlined_call_operand.<no memory space> [shape: f32[1,1], index: 7, kind: input, shape index: {}]
  %s8 = inlined_call_operand.hbm [shape: f32[1,128], index: 8, kind: output, shape index: {}]
  %s9 = sld [smem:[#allocation0]]
  $region42: #{tpu_custom_call.1} parent=0
    _
  %s11 = ssub.s32 1, %s9
  %s12 = scalar_select 0, %s11, %s9
  %v13 = vstv %s7
  %14 = vst [vmem:[#allocation2] sm:$0x1] %v13
  $region1: #{tpu_custom_call.1} parent=0
    #allocation3 [shape = 'u8[512]{0}', space=vmem, size = 0x400, scoped, tag = 'output window, operand 0, single buffered']
    #allocation4 [shape = 's32[1]{0}', space=sflag, size = 0x4, scoped, tag = 'scoped memory for tpu_custom_call.1']
    %15 = vsyncpa [#allocation4], 0
    // Predicated region
    $region2: #{tpu_custom_call.1} parent=1 // pred_check
      _
    $region3: #{tpu_custom_call.1} parent=1 // pred_check_branch
      %17 = sbr.rel (0) target = $region5
    $region4: #{tpu_custom_call.1} parent=1 // pred_region
      _
    $region5: #{tpu_custom_call.1} parent=1 // pred_fallthru
      _
    // Predicated region
    $region6: #{tpu_custom_call.1} parent=1 // pred_check
      _
    $region7: #{tpu_custom_call.1} parent=1 // pred_check_branch
      %19 = sbr.rel (0) target = $region9
    $region8: #{tpu_custom_call.1} parent=1 // pred_region
      _
    $region9: #{tpu_custom_call.1} parent=1 // pred_fallthru
      _
    // Predicated region
    $region10: #{tpu_custom_call.1} parent=1 // pred_check
      _
    $region11: #{tpu_custom_call.1} parent=1 // pred_check_branch
      %21 = sbr.rel (0) target = $region13
    $region12: #{tpu_custom_call.1} parent=1 // pred_region
      _
    $region13: #{tpu_custom_call.1} parent=1 // pred_fallthru
      _
    // Predicated region
    $region14: #{tpu_custom_call.1} parent=1 // pred_check
      _
    $region15: #{tpu_custom_call.1} parent=1 // pred_check_branch
      %23 = sbr.rel (0) target = $region17
    $region16: #{tpu_custom_call.1} parent=1 // pred_region
      _
    $region17: #{tpu_custom_call.1} parent=1 // pred_fallthru
      _
    // Predicated region
    $region18: #{tpu_custom_call.1} parent=1 // pred_check
      _
    $region19: #{tpu_custom_call.1} parent=1 // pred_check_branch
      %25 = sbr.rel (0) target = $region21
    $region20: #{tpu_custom_call.1} parent=1 // pred_region
      _
    $region21: #{tpu_custom_call.1} parent=1 // pred_fallthru
      _
    // Predicated region
    $region22: #{tpu_custom_call.1} parent=1 // pred_check
      _
    $region23: #{tpu_custom_call.1} parent=1 // pred_check_branch
      %27 = sbr.rel (0) target = $region25
    $region24: #{tpu_custom_call.1} parent=1 // pred_region
      _
    $region25: #{tpu_custom_call.1} parent=1 // pred_fallthru
      _
    // Predicated region
    $region26: #{tpu_custom_call.1} parent=1 // pred_check
      _
    $region27: #{tpu_custom_call.1} parent=1 // pred_check_branch
      %29 = sbr.rel (0) target = $region29
    $region28: #{tpu_custom_call.1} parent=1 // pred_region
      _
    $region29: #{tpu_custom_call.1} parent=1 // pred_fallthru
      _
    // Predicated region
    $region30: #{tpu_custom_call.1} parent=1 // pred_check
      _
    $region31: #{tpu_custom_call.1} parent=1 // pred_check_branch
      %31 = sbr.rel (0) target = $region33
    $region32: #{tpu_custom_call.1} parent=1 // pred_region
      _
    $region33: #{tpu_custom_call.1} parent=1 // pred_fallthru
      _
    %v32 = vld [vmem:[%s1] sm:$0xff]
    %v33 = vld [vmem:[%s1 + $0x8] sm:$0xff]
    %v34 = vld [vmem:[%s1 + $0x10] sm:$0xff]
    %v35 = vld [vmem:[%s1 + $0x18] sm:$0xff]
    %v36 = vld [vmem:[%s1 + $0x20] sm:$0xff]
    %v37 = vld [vmem:[%s1 + $0x28] sm:$0xff]
    %v38 = vld [vmem:[%s1 + $0x30] sm:$0xff]
    %v39 = vld [vmem:[%s1 + $0x38] sm:$0xff]
    %v40 = vld [vmem:[%s1 + $0x40] sm:$0xff]
    %v41 = vld [vmem:[%s1 + $0x48] sm:$0xff]
    %v42 = vld [vmem:[%s1 + $0x50] sm:$0xff]
    %v43 = vld [vmem:[%s1 + $0x58] sm:$0xff]
    %v44 = vld [vmem:[%s1 + $0x60] sm:$0xff]
    %v45 = vld [vmem:[%s1 + $0x68] sm:$0xff]
    %v46 = vld [vmem:[%s1 + $0x70] sm:$0xff]
    %v47 = vld [vmem:[%s1 + $0x78] sm:$0xff]
    %v48 = vld [vmem:[%s2] sm:$0xff]
    %v49 = vld [vmem:[%s2 + $0x8] sm:$0xff]
    %v50 = vld [vmem:[%s2 + $0x10] sm:$0xff]
    %v51 = vld [vmem:[%s2 + $0x18] sm:$0xff]
    %v52 = vld [vmem:[%s2 + $0x20] sm:$0xff]
    %v53 = vld [vmem:[%s2 + $0x28] sm:$0xff]
    %v54 = vld [vmem:[%s2 + $0x30] sm:$0xff]
    %v55 = vld [vmem:[%s2 + $0x38] sm:$0xff]
    %v56 = vld [vmem:[%s3] sm:$0xff]
    %v57 = vld [vmem:[%s3 + $0x8] sm:$0xff]
    %v58 = vld [vmem:[%s3 + $0x10] sm:$0xff]
    %v59 = vld [vmem:[%s3 + $0x18] sm:$0xff]
    %v60 = vld [vmem:[%s3 + $0x20] sm:$0xff]
    %v61 = vld [vmem:[%s3 + $0x28] sm:$0xff]
    %v62 = vld [vmem:[%s3 + $0x30] sm:$0xff]
    %v63 = vld [vmem:[%s3 + $0x38] sm:$0xff]
    %v64 = vld [vmem:[%s4] sm:$0xff]
    %v65 = vld [vmem:[%s4 + $0x8] sm:$0xff]
    %v66 = vld [vmem:[%s4 + $0x10] sm:$0xff]
    %v67 = vld [vmem:[%s4 + $0x18] sm:$0xff]
    %v68 = vld [vmem:[%s5] sm:$0xff]
    %v69 = vld [vmem:[%s5 + $0x8] sm:$0xff]
    %v70 = vld [vmem:[%s5 + $0x10] sm:$0xff]
    %v71 = vld [vmem:[%s5 + $0x18] sm:$0xff]
    %v72 = vld [vmem:[%s6] sm:$0xff]
    %v73 = vld [vmem:[%s6 + $0x8] sm:$0xff]
    %v74 = vld [vmem:[%s6 + $0x10] sm:$0xff]
    %v75 = vld [vmem:[%s6 + $0x18] sm:$0xff]
    %v76 = vld [vmem:[#allocation2] sm:$0x1]
    %v77 = vld [vmem:[%s0] sm:$0xff]
    %vm78 = vcmask 64512
    %v80 = vsel %vm78, %v32, 0
    %v83 = vsel %vm78, %v33, 0
    %v86 = vsel %vm78, %v34, 0
    %v89 = vsel %vm78, %v35, 0
    %v92 = vsel %vm78, %v36, 0
    %v95 = vsel %vm78, %v37, 0
    %v98 = vsel %vm78, %v38, 0
    %v101 = vsel %vm78, %v39, 0
    %v104 = vsel %vm78, %v40, 0
    %v107 = vsel %vm78, %v41, 0
    %v110 = vsel %vm78, %v42, 0
    %v113 = vsel %vm78, %v43, 0
    %v116 = vsel %vm78, %v44, 0
    %v119 = vsel %vm78, %v45, 0
    %v122 = vsel %vm78, %v46, 0
    %v125 = vsel %vm78, %v47, 0
    %127 = vmatpush.msra.mxu0 0.0
    %128 = vmatpush.msra.mxu0 0.0
    %129 = vmatpush.msra.mxu0 0.0
    %130 = vmatpush.msra.mxu0 0.0
    %131 = vmatpush.msra.mxu0 0.0
    %132 = vmatpush.msra.mxu0 0.0
    %133 = vmatpush.msra.mxu0 0.0
    %134 = vmatpush.msra.mxu0 0.0
    %135 = vmatpush.msra.mxu0 0.0
    %136 = vmatpush.msra.mxu0 0.0
    %137 = vmatpush.msra.mxu0 0.0
    %138 = vmatpush.msra.mxu0 0.0
    %139 = vmatpush.msra.mxu0 0.0
    %140 = vmatpush.msra.mxu0 0.0
    %141 = vmatpush.msra.mxu0 0.0
    %142 = vmatpush.msra.mxu0 %v77
    %143 = vmatmul.f32.gmra.mxu0 %v80
    %v144 = vpop.f32.mrf.mxu0
    %v145 = vadd.f32 0.0, %v144
    %146 = vmatmul.f32.gmra.mxu0 %v83
    %v147 = vpop.f32.mrf.mxu0
    %v148 = vadd.f32 0.0, %v147
    %149 = vmatmul.f32.gmra.mxu0 %v86
    %v150 = vpop.f32.mrf.mxu0
    %v151 = vadd.f32 0.0, %v150
    %152 = vmatmul.f32.gmra.mxu0 %v89
    %v153 = vpop.f32.mrf.mxu0
    %v154 = vadd.f32 0.0, %v153
    %155 = vmatmul.f32.gmra.mxu0 %v92
    %v156 = vpop.f32.mrf.mxu0
    %v157 = vadd.f32 0.0, %v156
    %158 = vmatmul.f32.gmra.mxu0 %v95
    %v159 = vpop.f32.mrf.mxu0
    %v160 = vadd.f32 0.0, %v159
    %161 = vmatmul.f32.gmra.mxu0 %v98
    %v162 = vpop.f32.mrf.mxu0
    %v163 = vadd.f32 0.0, %v162
    %164 = vmatmul.f32.gmra.mxu0 %v101
    %v165 = vpop.f32.mrf.mxu0
    %v166 = vadd.f32 0.0, %v165
    %167 = vmatmul.f32.gmra.mxu0 %v104
    %v168 = vpop.f32.mrf.mxu0
    %v169 = vadd.f32 0.0, %v168
    %170 = vmatmul.f32.gmra.mxu0 %v107
    %v171 = vpop.f32.mrf.mxu0
    %v172 = vadd.f32 0.0, %v171
    %173 = vmatmul.f32.gmra.mxu0 %v110
    %v174 = vpop.f32.mrf.mxu0
    %v175 = vadd.f32 0.0, %v174
    %176 = vmatmul.f32.gmra.mxu0 %v113
    %v177 = vpop.f32.mrf.mxu0
    %v178 = vadd.f32 0.0, %v177
    %179 = vmatmul.f32.gmra.mxu0 %v116
    %v180 = vpop.f32.mrf.mxu0
    %v181 = vadd.f32 0.0, %v180
    %182 = vmatmul.f32.gmra.mxu0 %v119
    %v183 = vpop.f32.mrf.mxu0
    %v184 = vadd.f32 0.0, %v183
    %185 = vmatmul.f32.gmra.mxu0 %v122
    %v186 = vpop.f32.mrf.mxu0
    %v187 = vadd.f32 0.0, %v186
    %188 = vmatmul.f32.gmra.mxu0 %v125
    %v189 = vpop.f32.mrf.mxu0
    %v190 = vadd.f32 0.0, %v189
    %191 = vdwg.mxu0
    %v192 = vmax.f32 %v145, 0.0
    %v193 = vmax.f32 %v148, 0.0
    %v194 = vmax.f32 %v151, 0.0
    %v195 = vmax.f32 %v154, 0.0
    %v196 = vmax.f32 %v157, 0.0
    %v197 = vmax.f32 %v160, 0.0
    %v198 = vmax.f32 %v163, 0.0
    %v199 = vmax.f32 %v166, 0.0
    %v200 = vmax.f32 %v169, 0.0
    %v201 = vmax.f32 %v172, 0.0
    %v202 = vmax.f32 %v175, 0.0
    %v203 = vmax.f32 %v178, 0.0
    %v204 = vmax.f32 %v181, 0.0
    %v205 = vmax.f32 %v184, 0.0
    %v206 = vmax.f32 %v187, 0.0
    %v207 = vmax.f32 %v190, 0.0
    %209 = vset.pattern.permute.xlu0 0
    %210 = vperm.xlu0 %209, %v56
    %v211 = vpop.permute.xlu0 %210
    %214 = vset.pattern.permute.xlu0 0
    %215 = vperm.xlu0 %214, %v57
    %v216 = vpop.permute.xlu0 %215
    %219 = vset.pattern.permute.xlu0 0
    %220 = vperm.xlu0 %219, %v58
    %v221 = vpop.permute.xlu0 %220
    %224 = vset.pattern.permute.xlu0 0
    %225 = vperm.xlu0 %224, %v59
    %v226 = vpop.permute.xlu0 %225
    %229 = vset.pattern.permute.xlu0 0
    %230 = vperm.xlu0 %229, %v60
    %v231 = vpop.permute.xlu0 %230
    %234 = vset.pattern.permute.xlu0 0
    %235 = vperm.xlu0 %234, %v61
    %v236 = vpop.permute.xlu0 %235
    %239 = vset.pattern.permute.xlu0 0
    %240 = vperm.xlu0 %239, %v62
    %v241 = vpop.permute.xlu0 %240
    %244 = vset.pattern.permute.xlu0 0
    %245 = vperm.xlu0 %244, %v63
    %v246 = vpop.permute.xlu0 %245
    %248 = vmatpush.msra.mxu0 %v207
    %249 = vmatpush.msra.mxu0 %v206
    %250 = vmatpush.msra.mxu0 %v205
    %251 = vmatpush.msra.mxu0 %v204
    %252 = vmatpush.msra.mxu0 %v203
    %253 = vmatpush.msra.mxu0 %v202
    %254 = vmatpush.msra.mxu0 %v201
    %255 = vmatpush.msra.mxu0 %v200
    %256 = vmatpush.msra.mxu0 %v199
    %257 = vmatpush.msra.mxu0 %v198
    %258 = vmatpush.msra.mxu0 %v197
    %259 = vmatpush.msra.mxu0 %v196
    %260 = vmatpush.msra.mxu0 %v195
    %261 = vmatpush.msra.mxu0 %v194
    %262 = vmatpush.msra.mxu0 %v193
    %263 = vmatpush.msra.mxu0 %v192
    %264 = vmatmul.f32.gmra.mxu0 %v48
    %v265 = vpop.f32.mrf.mxu0
    %v266 = vadd.f32 %v211, %v265
    %267 = vmatmul.f32.gmra.mxu0 %v49
    %v268 = vpop.f32.mrf.mxu0
    %v269 = vadd.f32 %v216, %v268
    %270 = vmatmul.f32.gmra.mxu0 %v50
    %v271 = vpop.f32.mrf.mxu0
    %v272 = vadd.f32 %v221, %v271
    %273 = vmatmul.f32.gmra.mxu0 %v51
    %v274 = vpop.f32.mrf.mxu0
    %v275 = vadd.f32 %v226, %v274
    %276 = vmatmul.f32.gmra.mxu0 %v52
    %v277 = vpop.f32.mrf.mxu0
    %v278 = vadd.f32 %v231, %v277
    %279 = vmatmul.f32.gmra.mxu0 %v53
    %v280 = vpop.f32.mrf.mxu0
    %v281 = vadd.f32 %v236, %v280
    %282 = vmatmul.f32.gmra.mxu0 %v54
    %v283 = vpop.f32.mrf.mxu0
    %v284 = vadd.f32 %v241, %v283
    %285 = vmatmul.f32.gmra.mxu0 %v55
    %v286 = vpop.f32.mrf.mxu0
    %v287 = vadd.f32 %v246, %v286
    %288 = vdwg.mxu0
    %v289 = vmax.f32 %v266, 0.0
    %v290 = vmax.f32 %v269, 0.0
    %v291 = vmax.f32 %v272, 0.0
    %v292 = vmax.f32 %v275, 0.0
    %v293 = vmax.f32 %v278, 0.0
    %v294 = vmax.f32 %v281, 0.0
    %v295 = vmax.f32 %v284, 0.0
    %v296 = vmax.f32 %v287, 0.0
    %298 = vset.pattern.permute.xlu0 0
    %299 = vperm.xlu0 %298, %v68
    %v300 = vpop.permute.xlu0 %299
    %303 = vset.pattern.permute.xlu0 0
    %304 = vperm.xlu0 %303, %v69
    %v305 = vpop.permute.xlu0 %304
    %308 = vset.pattern.permute.xlu0 0
    %309 = vperm.xlu0 %308, %v70
    %v310 = vpop.permute.xlu0 %309
    %313 = vset.pattern.permute.xlu0 0
    %314 = vperm.xlu0 %313, %v71
    %v315 = vpop.permute.xlu0 %314
    %vm317 = vcmask 523264
    %v319 = vsel %vm317, %v64, 0
    %v322 = vsel %vm317, %v65, 0
    %v325 = vsel %vm317, %v66, 0
    %v328 = vsel %vm317, %v67, 0
    %330 = vmatpush.msra.mxu0 0.0
    %331 = vmatpush.msra.mxu0 0.0
    %332 = vmatpush.msra.mxu0 0.0
    %333 = vmatpush.msra.mxu0 0.0
    %334 = vmatpush.msra.mxu0 0.0
    %335 = vmatpush.msra.mxu0 0.0
    %336 = vmatpush.msra.mxu0 0.0
    %337 = vmatpush.msra.mxu0 0.0
    %338 = vmatpush.msra.mxu0 %v296
    %339 = vmatpush.msra.mxu0 %v295
    %340 = vmatpush.msra.mxu0 %v294
    %341 = vmatpush.msra.mxu0 %v293
    %342 = vmatpush.msra.mxu0 %v292
    %343 = vmatpush.msra.mxu0 %v291
    %344 = vmatpush.msra.mxu0 %v290
    %345 = vmatpush.msra.mxu0 %v289
    %346 = vmatmul.f32.gmra.mxu0 %v319
    %v347 = vpop.f32.mrf.mxu0
    %v348 = vadd.f32 %v300, %v347
    %349 = vmatmul.f32.gmra.mxu0 %v322
    %v350 = vpop.f32.mrf.mxu0
    %v351 = vadd.f32 %v305, %v350
    %352 = vmatmul.f32.gmra.mxu0 %v325
    %v353 = vpop.f32.mrf.mxu0
    %v354 = vadd.f32 %v310, %v353
    %355 = vmatmul.f32.gmra.mxu0 %v328
    %v356 = vpop.f32.mrf.mxu0
    %v357 = vadd.f32 %v315, %v356
    %358 = vdwg.mxu0
    %v359 = vmax.f32 %v348, 0.0
    %v360 = vmax.f32 %v351, 0.0
    %v361 = vmax.f32 %v354, 0.0
    %v362 = vmax.f32 %v357, 0.0
    %364 = vset.pattern.permute.xlu0 0
    %365 = vperm.xlu0 %364, %v72
    %v366 = vpop.permute.xlu0 %365
    %369 = vset.pattern.permute.xlu0 0
    %370 = vperm.xlu0 %369, %v73
    %v371 = vpop.permute.xlu0 %370
    %374 = vset.pattern.permute.xlu0 0
    %375 = vperm.xlu0 %374, %v74
    %v376 = vpop.permute.xlu0 %375
    %379 = vset.pattern.permute.xlu0 0
    %380 = vperm.xlu0 %379, %v75
    %v381 = vpop.permute.xlu0 %380
    %v383 = vmul.f32 %v359, %v366
    %v384 = vmul.f32 %v360, %v371
    %v385 = vmul.f32 %v361, %v376
    %v386 = vmul.f32 %v362, %v381
    %v387 = vadd.f32 %v383, %v384
    %v388 = vadd.f32 %v387, %v385
    %v389 = vadd.f32 %v388, %v386
    %v390 = vrot.slane %v389, 4
    %v391 = vadd.f32 %v389, %v390
    %v392 = vrot.slane %v391, 2
    %v393 = vadd.f32 %v391, %v392
    %v394 = vrot.slane %v393, 1
    %v395 = vadd.f32 %v393, %v394
    %397 = vset.pattern.permute.xlu0 0
    %398 = vperm.xlu0 %397, %v76
    %v399 = vpop.permute.xlu0 %398
    %v401 = vperm.slane %v399, 0
    %v402 = vadd.f32 %v395, %v401
    %v403 = vxor.u32 %v402, 2147483648
    %v404 = vmul.f32 %v403, 1.442695
    %v405 = vpow.pop %v404
    %v406 = vadd.f32 %v405, 1.0
    %v407 = vrcp.pop %v406
    %v408 = vmul.f32 %v406, %v407
    %v409 = vsub.f32 1.0, %v408
    %v410 = vmul.f32 %v407, %v409
    %v411 = vadd.f32 %v407, %v410
    %vm412 = vweird.f32 %v406
    %vm413 = vweird.f32 %v407
    %vm414 = vmor %vm412, %vm413
    %v415 = vsel %vm414, %v407, %v411
    %v416 = vand.u32 2147483647, %v406
    %vm417 = vcmp.eq.f32.partialorder %v416, 8.507059e+37
    %v418 = vand.u32 %v406, 2147483648
    %v419 = vor.u32 1.1754944e-38, %v418
    %v420 = vsel %vm417, %v419, %v415
    %v421 = vmul.f32 1.0, %v420
    %422 = vst [vmem:[#allocation3] sm:$0x1] %v421
    // Predicated region
    $region34: #{tpu_custom_call.1} parent=1 // pred_check
      _
    $region35: #{tpu_custom_call.1} parent=1 // pred_check_branch
      %424 = sbr.rel (0) target = $region37
    $region36: #{tpu_custom_call.1} parent=1 // pred_region
      %426 = vsyncadd [#allocation4], 0
      %s428 = sshll.u32 [#allocation3], 4
      %s429 = int_to_ptr.vmem [resolvable:$true] %s428
      %s430 = sshll.u32 %s8, 4
      %s431 = int_to_ptr.hbm [resolvable:$true] %s430
      %433 = dma.vmem_to_hbm [thread:$0]  %s429, 16, %s431, [#allocation4]
    $region37: #{tpu_custom_call.1} parent=1 // pred_fallthru
      _
    // Predicated region
    $region38: #{tpu_custom_call.1} parent=1 // pred_check
      _
    $region39: #{tpu_custom_call.1} parent=1 // pred_check_branch
      %435 = sbr.rel (0) target = $region41
    $region40: #{tpu_custom_call.1} parent=1 // pred_region
      %437 = dma.done [#allocation4], 16
    $region41: #{tpu_custom_call.1} parent=1 // pred_fallthru
      _
    %438 = vsyncpa [#allocation4], 1

</llo_original>
